<compile_context>
chip_gen: v7x
topology: tpu7x:2x2x1
jax: 0.10.0
libtpu: 0.0.40
codegen_flags: <defaults>
</compile_context>

<pallas_src>
import functools

import jax
import jax.numpy as jnp
from jax.experimental import pallas as pl
from jax.experimental.pallas import tpu as pltpu


def _round_up(x, m):
    return ((x + m - 1) // m) * m


# ---------------------------------------------------------------------------
# Pallas kernel (transposed / lane-dense orientation, batch on lanes).
#   xs_ref : (S, TB)    state tile          (bf16)
#   xn_ref : (S, TB)    next_state tile     (bf16)
#   w1_ref : (3H, S)    [dens; reward; value] first-layer weights, transposed (bf16)
#   b1_ref : (3H, 1)    packed first-layer biases                             (f32)
#   w2_ref : (3, 3H)    block-diagonal second-layer weights, transposed       (f32)
#   b2_ref : (3, 1)     packed second-layer biases                            (f32)
#   outs_ref: (3, TB)   rows = [dens, reward, value] for the state tile
#   outn_ref: (1, TB)   value for the next_state tile
# ---------------------------------------------------------------------------
def _irl_kernel(xs_ref, xn_ref, w1_ref, b1_ref, w2_ref, b2_ref,
                outs_ref, outn_ref, *, hidden):
    w1 = w1_ref[...]          # (3H, S) bf16
    b1 = b1_ref[...]          # (3H, 1) f32
    w2 = w2_ref[...]          # (3, 3H) f32
    b2 = b2_ref[...]          # (3, 1)  f32

    # state path: all three heads through the packed slabs (one wide matmul).
    h_s = jnp.dot(w1, xs_ref[...], preferred_element_type=jnp.float32)   # (3H, TB)
    h_s = jnp.maximum(h_s + b1, 0.0)
    outs_ref[...] = (
        jnp.dot(w2, h_s, preferred_element_type=jnp.float32) + b2
    ).astype(outs_ref.dtype)                                             # (3, TB)

    # next_state path: value head only (rows [2H:3H] of the packed slabs).
    h_n = jnp.dot(w1[2 * hidden:, :], xn_ref[...],
                  preferred_element_type=jnp.float32)                    # (H, TB)
    h_n = jnp.maximum(h_n + b1[2 * hidden:, :], 0.0)
    outn_ref[...] = (
        jnp.dot(w2[2:3, 2 * hidden:], h_n,
                preferred_element_type=jnp.float32) + b2[2:3, :]
    ).astype(outn_ref.dtype)                                             # (1, TB)


# ---------------------------------------------------------------------------
# One-time parameter packing (hoisted out of the per-call wrapper).
# params: dict with keys 'dens', 'reward', 'value', each a tuple
#   (w1 (S,H), b1 (1,H), w2 (H,1), b2 (1,1)).
# ---------------------------------------------------------------------------
def pack_params(params):
    d_w1, d_b1, d_w2, d_b2 = params["dens"]
    r_w1, r_b1, r_w2, r_b2 = params["reward"]
    v_w1, v_b1, v_w2, v_b2 = params["value"]
    H = d_w1.shape[1]

    # First layer: transposed + packed, bf16 (it feeds the bf16 MXU matmul).
    w1_T = jnp.concatenate([d_w1.T, r_w1.T, v_w1.T], axis=0).astype(jnp.bfloat16)  # (3H, S)
    b1_c = jnp.concatenate([d_b1, r_b1, v_b1], axis=1).T                           # (3H, 1)

    # Second layer: block-diagonal, transposed -> (3, 3H), kept f32.
    z = jnp.zeros((1, H), jnp.float32)
    w2_T = jnp.concatenate(
        [
            jnp.concatenate([d_w2.T, z, z], axis=1),
            jnp.concatenate([z, r_w2.T, z], axis=1),
            jnp.concatenate([z, z, v_w2.T], axis=1),
        ],
        axis=0,
    )                                                                               # (3, 3H)
    b2_c = jnp.concatenate([d_b2, r_b2, v_b2], axis=1).T                            # (3, 1)

    return {"w1_T": w1_T, "b1": b1_c, "w2_T": w2_T, "b2": b2_c, "hidden": H}


# ---------------------------------------------------------------------------
# Forward wrapper: lane-major bf16 batch streams, batch-parallel grid.
# ---------------------------------------------------------------------------
def irl_net_forward(state, next_state, packed):
    B, S = state.shape
    H = packed["hidden"]

    # --- choose batch tile (lanes) and padded lane count --------------------
    LANE = 128
    TB_CAP = 8192  # ~6 MiB of VMEM working set per grid step -> safe everywhere
    if B <= LANE:
        TB, Bp = B, B                     # single step, full-dim block (tiny batch)
    else:
        Bp0 = _round_up(B, LANE)
        n_tiles = pl.cdiv(Bp0, TB_CAP)
        if n_tiles == 1 and Bp0 >= 2 * LANE:
            n_tiles = 2                   # >= 2 grid steps: both TCs on v7x
        TB = _round_up(pl.cdiv(Bp0, n_tiles), LANE)
        Bp = TB * n_tiles

    # --- lane-major (transposed) bf16 batch streams; no concat copy ---------
    xs = state.T.astype(jnp.bfloat16)         # (S, B)
    xn = next_state.T.astype(jnp.bfloat16)    # (S, B)
    if Bp != B:
        # only for large, non-128-multiple batches; padded lanes are zeros and
        # are sliced off below.
        xs = jnp.pad(xs, ((0, 0), (0, Bp - B)))
        xn = jnp.pad(xn, ((0, 0), (0, Bp - B)))

    kernel = functools.partial(_irl_kernel, hidden=H)

    def const_spec(shape):
        return pl.BlockSpec(shape, lambda i: (0, 0))   # weights resident across grid

    out_s, out_n = pl.pallas_call(
        kernel,
        out_shape=(
            jax.ShapeDtypeStruct((3, Bp), jnp.float32),
            jax.ShapeDtypeStruct((1, Bp), jnp.float32),
        ),
        grid=(Bp // TB,),
        in_specs=[
            pl.BlockSpec((S, TB), lambda i: (0, i)),   # state tile     (pipelined)
            pl.BlockSpec((S, TB), lambda i: (0, i)),   # next_state tile(pipelined)
            const_spec((3 * H, S)),                    # W1^T
            const_spec((3 * H, 1)),                    # b1
            const_spec((3, 3 * H)),                    # W2^T (block diagonal)
            const_spec((3, 1)),                        # b2
        ],
        out_specs=(
            pl.BlockSpec((3, TB), lambda i: (0, i)),   # [dens; reward; v_x]
            pl.BlockSpec((1, TB), lambda i: (0, i)),   # [v_y]
        ),
        compiler_params=pltpu.CompilerParams(
            dimension_semantics=("parallel",),
            vmem_limit_bytes=32 * 1024 * 1024,
        ),
    )(xs, xn, packed["w1_T"], packed["b1"], packed["w2_T"], packed["b2"])

    dens = out_s[0, :B].reshape(B, 1)
    q_hat = out_s[1, :B].reshape(B, 1)
    v_x = out_s[2, :B].reshape(B, 1)
    v_y = out_n[0, :B].reshape(B, 1)
    return dens, q_hat, v_x, v_y


# ---------------------------------------------------------------------------
# Deterministic parameter construction (synthetic, no checkpoint loading)
# ---------------------------------------------------------------------------
def make_params(key, state_space, hidden):
    def make_head(k):
        k1, k2, k3, k4 = jax.random.split(k, 4)
        w1 = jax.random.normal(k1, (state_space, hidden), jnp.float32) * 0.1
        b1 = jax.random.normal(k2, (1, hidden), jnp.float32) * 0.1
        w2 = jax.random.normal(k3, (hidden, 1), jnp.float32) * 0.1
        b2 = jax.random.normal(k4, (1, 1), jnp.float32) * 0.1
        return (w1, b1, w2, b2)

    kd, kr, kv = jax.random.split(key, 3)
    return {"dens": make_head(kd), "reward": make_head(kr), "value": make_head(kv)}


# Pure-JAX reference.  quantize_bf16=True applies the same input/W1 bf16 cast
# the kernel uses (apples-to-apples tight check); False is the full-f32 model.
def _ref_forward(state, next_state, params, quantize_bf16=False):
    def mlp(x, p):
        w1, b1, w2, b2 = p
        if quantize_bf16:
            x = x.astype(jnp.bfloat16).astype(jnp.float32)
            w1 = w1.astype(jnp.bfloat16).astype(jnp.float32)
        h = jnp.maximum(x @ w1 + b1, 0.0)
        return h @ w2 + b2

    return (
        mlp(state, params["dens"]),
        mlp(state, params["reward"]),
        mlp(state, params["value"]),
        mlp(next_state, params["value"]),
    )


if __name__ == "__main__":
    B, STATE_SPACE, HIDDEN = 8, 4, 32

    key = jax.random.PRNGKey(0)
    k_state, k_next, k_params = jax.random.split(key, 3)

    state = jax.random.normal(k_state, (B, STATE_SPACE), jnp.float32)
    next_state = jax.random.normal(k_next, (B, STATE_SPACE), jnp.float32)
    params = make_params(k_params, STATE_SPACE, HIDDEN)
    packed = pack_params(params)  # packed once, outside the per-step wrapper

    dens, q_hat, v_x, v_y = irl_net_forward(state, next_state, packed)
    jax.block_until_ready((dens, q_hat, v_x, v_y))

    # Tight check vs a reference that applies the same bf16 input/W1 cast.
    ref_q = _ref_forward(state, next_state, params, quantize_bf16=True)
    for got, want in zip((dens, q_hat, v_x, v_y), ref_q):
        assert got.shape == want.shape == (B, 1)
        assert jnp.allclose(got, want, atol=1e-4, rtol=1e-4)

    # Loose check vs the full-f32 reference (only bf16 batch-stream rounding).
    ref_f = _ref_forward(state, next_state, params, quantize_bf16=False)
    for got, want in zip((dens, q_hat, v_x, v_y), ref_f):
        assert jnp.allclose(got, want, atol=5e-2, rtol=5e-2)

    print("KERNEL_OK")
</pallas_src>

<mosaic_0001>
module attributes {stable_mosaic.version = 11 : i64} {
  func.func @_irl_kernel(%arg0: i32, %arg1: memref<4x8xbf16, #tpu.memory_space<vmem>>, %arg2: memref<4x8xbf16, #tpu.memory_space<vmem>>, %arg3: memref<96x4xbf16, #tpu.memory_space<vmem>>, %arg4: memref<96x1xf32, #tpu.memory_space<vmem>>, %arg5: memref<3x96xf32, #tpu.memory_space<vmem>>, %arg6: memref<3x1xf32, #tpu.memory_space<vmem>>, %arg7: memref<3x8xf32, #tpu.memory_space<vmem>>, %arg8: memref<1x8xf32, #tpu.memory_space<vmem>>) attributes {dimension_semantics = [#tpu.dimension_semantics<parallel>], iteration_bounds = array<i64: 1>, scalar_prefetch = 0 : i64, scratch_operands = 0 : i64, tpu.core_type = #tpu.core_type<tc>, window_params = [{transform_indices = @transform_0, window_bounds = array<i64: 4, 8>}, {transform_indices = @transform_1, window_bounds = array<i64: 4, 8>}, {pipeline_mode = #tpu.pipeline_mode<synchronous>, transform_indices = @transform_2, window_bounds = array<i64: 96, 4>}, {pipeline_mode = #tpu.pipeline_mode<synchronous>, transform_indices = @transform_3, window_bounds = array<i64: 96, 1>}, {pipeline_mode = #tpu.pipeline_mode<synchronous>, transform_indices = @transform_4, window_bounds = array<i64: 3, 96>}, {pipeline_mode = #tpu.pipeline_mode<synchronous>, transform_indices = @transform_5, window_bounds = array<i64: 3, 1>}, {transform_indices = @transform_6, window_bounds = array<i64: 3, 8>}, {transform_indices = @transform_7, window_bounds = array<i64: 1, 8>}]} {
    %c0 = arith.constant 0 : index
    %c0_0 = arith.constant 0 : index
    %0 = vector.load %arg3[%c0, %c0_0] : memref<96x4xbf16, #tpu.memory_space<vmem>>, vector<96x4xbf16>
    %c0_1 = arith.constant 0 : index
    %c0_2 = arith.constant 0 : index
    %1 = vector.load %arg4[%c0_1, %c0_2] : memref<96x1xf32, #tpu.memory_space<vmem>>, vector<96x1xf32>
    %c0_3 = arith.constant 0 : index
    %c0_4 = arith.constant 0 : index
    %2 = vector.load %arg5[%c0_3, %c0_4] : memref<3x96xf32, #tpu.memory_space<vmem>>, vector<3x96xf32>
    %c0_5 = arith.constant 0 : index
    %c0_6 = arith.constant 0 : index
    %3 = vector.load %arg6[%c0_5, %c0_6] : memref<3x1xf32, #tpu.memory_space<vmem>>, vector<3x1xf32>
    %c0_7 = arith.constant 0 : index
    %c0_8 = arith.constant 0 : index
    %4 = vector.load %arg1[%c0_7, %c0_8] : memref<4x8xbf16, #tpu.memory_space<vmem>>, vector<4x8xbf16>
    %cst = arith.constant dense<0.000000e+00> : vector<96x8xf32>
    %5 = tpu.matmul %0, %4, %cst {dimension_numbers = #tpu.dot_dimension_numbers<[1], [0], [0], [1], [0, 0, 1, 1], [], []>} : vector<96x4xbf16>, vector<4x8xbf16>, vector<96x8xf32> -> vector<96x8xf32>
    %6 = vector.broadcast %1 : vector<96x1xf32> to vector<96x8xf32>
    %7 = arith.addf %5, %6 : vector<96x8xf32>
    %cst_9 = arith.constant 0.000000e+00 : f32
    %8 = vector.broadcast %cst_9 : f32 to vector<96x8xf32>
    %9 = arith.maximumf %7, %8 : vector<96x8xf32>
    %cst_10 = arith.constant dense<0.000000e+00> : vector<3x8xf32>
    %10 = tpu.matmul %2, %9, %cst_10 {dimension_numbers = #tpu.dot_dimension_numbers<[1], [0], [0], [1], [0, 0, 1, 1], [], []>} : vector<3x96xf32>, vector<96x8xf32>, vector<3x8xf32> -> vector<3x8xf32>
    %11 = vector.broadcast %3 : vector<3x1xf32> to vector<3x8xf32>
    %12 = arith.addf %10, %11 : vector<3x8xf32>
    %c0_11 = arith.constant 0 : index
    %c0_12 = arith.constant 0 : index
    %13 = vector.load %arg7[%c0_11, %c0_12] : memref<3x8xf32, #tpu.memory_space<vmem>>, vector<3x8xf32>
    tpu.vector_store %arg7[%c0_11, %c0_12], %12 {strides = array<i32>} : memref<3x8xf32, #tpu.memory_space<vmem>>, vector<3x8xf32>,
    %14 = vector.extract_strided_slice %0 {offsets = [64, 0], sizes = [32, 4], strides = [1, 1]} : vector<96x4xbf16> to vector<32x4xbf16>
    %c0_13 = arith.constant 0 : index
    %c0_14 = arith.constant 0 : index
    %15 = vector.load %arg2[%c0_13, %c0_14] : memref<4x8xbf16, #tpu.memory_space<vmem>>, vector<4x8xbf16>
    %cst_15 = arith.constant dense<0.000000e+00> : vector<32x8xf32>
    %16 = tpu.matmul %14, %15, %cst_15 {dimension_numbers = #tpu.dot_dimension_numbers<[1], [0], [0], [1], [0, 0, 1, 1], [], []>} : vector<32x4xbf16>, vector<4x8xbf16>, vector<32x8xf32> -> vector<32x8xf32>
    %17 = vector.extract_strided_slice %1 {offsets = [64, 0], sizes = [32, 1], strides = [1, 1]} : vector<96x1xf32> to vector<32x1xf32>
    %18 = vector.broadcast %17 : vector<32x1xf32> to vector<32x8xf32>
    %19 = arith.addf %16, %18 : vector<32x8xf32>
    %cst_16 = arith.constant 0.000000e+00 : f32
    %20 = vector.broadcast %cst_16 : f32 to vector<32x8xf32>
    %21 = arith.maximumf %19, %20 : vector<32x8xf32>
    %22 = vector.extract_strided_slice %2 {offsets = [2, 64], sizes = [1, 32], strides = [1, 1]} : vector<3x96xf32> to vector<1x32xf32>
    %cst_17 = arith.constant dense<0.000000e+00> : vector<1x8xf32>
    %23 = tpu.matmul %22, %21, %cst_17 {dimension_numbers = #tpu.dot_dimension_numbers<[1], [0], [0], [1], [0, 0, 1, 1], [], []>} : vector<1x32xf32>, vector<32x8xf32>, vector<1x8xf32> -> vector<1x8xf32>
    %24 = vector.extract_strided_slice %3 {offsets = [2, 0], sizes = [1, 1], strides = [1, 1]} : vector<3x1xf32> to vector<1x1xf32>
    %25 = vector.broadcast %24 : vector<1x1xf32> to vector<1x8xf32>
    %26 = arith.addf %23, %25 : vector<1x8xf32>
    %c0_18 = arith.constant 0 : index
    %c0_19 = arith.constant 0 : index
    %27 = vector.load %arg8[%c0_18, %c0_19] : memref<1x8xf32, #tpu.memory_space<vmem>>, vector<1x8xf32>
    tpu.vector_store %arg8[%c0_18, %c0_19], %26 {strides = array<i32>} : memref<1x8xf32, #tpu.memory_space<vmem>>, vector<1x8xf32>,
    return
  }
  func.func @transform_0(%arg0: i32) -> (i32, i32) {
    %c0_i32 = arith.constant 0 : i32
    %c0_i32_0 = arith.constant 0 : i32
    return %c0_i32, %arg0 : i32, i32
  }
  func.func @transform_1(%arg0: i32) -> (i32, i32) {
    %c0_i32 = arith.constant 0 : i32
    %c0_i32_0 = arith.constant 0 : i32
    return %c0_i32, %arg0 : i32, i32
  }
  func.func @transform_2(%arg0: i32) -> (i32, i32) {
    %c0_i32 = arith.constant 0 : i32
    %c0_i32_0 = arith.constant 0 : i32
    %c0_i32_1 = arith.constant 0 : i32
    return %c0_i32, %c0_i32_0 : i32, i32
  }
  func.func @transform_3(%arg0: i32) -> (i32, i32) {
    %c0_i32 = arith.constant 0 : i32
    %c0_i32_0 = arith.constant 0 : i32
    %c0_i32_1 = arith.constant 0 : i32
    return %c0_i32, %c0_i32_0 : i32, i32
  }
  func.func @transform_4(%arg0: i32) -> (i32, i32) {
    %c0_i32 = arith.constant 0 : i32
    %c0_i32_0 = arith.constant 0 : i32
    %c0_i32_1 = arith.constant 0 : i32
    return %c0_i32, %c0_i32_0 : i32, i32
  }
  func.func @transform_5(%arg0: i32) -> (i32, i32) {
    %c0_i32 = arith.constant 0 : i32
    %c0_i32_0 = arith.constant 0 : i32
    %c0_i32_1 = arith.constant 0 : i32
    return %c0_i32, %c0_i32_0 : i32, i32
  }
  func.func @transform_6(%arg0: i32) -> (i32, i32) {
    %c0_i32 = arith.constant 0 : i32
    %c0_i32_0 = arith.constant 0 : i32
    return %c0_i32, %arg0 : i32, i32
  }
  func.func @transform_7(%arg0: i32) -> (i32, i32) {
    %c0_i32 = arith.constant 0 : i32
    %c0_i32_0 = arith.constant 0 : i32
    return %c0_i32, %arg0 : i32, i32
  }
}

</mosaic_0001>

<llo_original>
// kernel: tpu_custom_call.1
$region0: #{tpu_custom_call.1}
  #allocation0 [shape = 'u32[]', space=smem, size = 0x4, offset = 0x4, fixed_abs, tag = 'smem constant byte address 0x4 - core index']
  #allocation1 [shape = 'u32[144,128]{1,0:T(1,128)}', space=vmem, size = 0x12000, scoped, tag = 'internal scratch']
  %s0 = inlined_call_operand.vmem [shape: bf16[4,8], index: 0, kind: input, shape index: {}]
  %s1 = inlined_call_operand.vmem [shape: bf16[4,8], index: 1, kind: input, shape index: {}]
  %s2 = inlined_call_operand.vmem [shape: bf16[96,4], index: 2, kind: input, shape index: {}]
  %s3 = inlined_call_operand.vmem [shape: f32[96,1], index: 3, kind: input, shape index: {}]
  %s4 = inlined_call_operand.vmem [shape: f32[3,96], index: 4, kind: input, shape index: {}]
  %s5 = inlined_call_operand.vmem [shape: f32[3,1], index: 5, kind: input, shape index: {}]
  %s6 = inlined_call_operand.hbm [shape: f32[3,8], index: 6, kind: output, shape index: {0}]
  %s7 = inlined_call_operand.hbm [shape: f32[1,8], index: 7, kind: output, shape index: {1}]
  %8 = xla_tuple %s6, %s7
  %s9 = sld [smem:[#allocation0]]
  $region42: #{tpu_custom_call.1} parent=0
    _
  %s11 = ssub.s32 1, %s9
  %s12 = scalar_select 0, %s11, %s9
  $region1: #{tpu_custom_call.1} parent=0
    #allocation2 [shape = 'u8[2048]{0}', space=vmem, size = 0x800, scoped, tag = 'output window, operand 0, single buffered']
    #allocation3 [shape = 's32[1]{0}', space=sflag, size = 0x4, scoped, tag = 'scoped memory for tpu_custom_call.1']
    #allocation4 [shape = 'u8[512]{0}', space=vmem, size = 0x400, scoped, tag = 'output window, operand 1, single buffered']
    #allocation5 [shape = 's32[1]{0}', space=sflag, size = 0x4, scoped, tag = 'scoped memory for tpu_custom_call.1']
    %13 = vsyncpa [#allocation3], 0
    %14 = vsyncpa [#allocation5], 0
    // Predicated region
    $region2: #{tpu_custom_call.1} parent=1 // pred_check
      _
    $region3: #{tpu_custom_call.1} parent=1 // pred_check_branch
      %16 = sbr.rel (0) target = $region5
    $region4: #{tpu_custom_call.1} parent=1 // pred_region
      _
    $region5: #{tpu_custom_call.1} parent=1 // pred_fallthru
      _
    // Predicated region
    $region6: #{tpu_custom_call.1} parent=1 // pred_check
      _
    $region7: #{tpu_custom_call.1} parent=1 // pred_check_branch
      %18 = sbr.rel (0) target = $region9
    $region8: #{tpu_custom_call.1} parent=1 // pred_region
      _
    $region9: #{tpu_custom_call.1} parent=1 // pred_fallthru
      _
    // Predicated region
    $region10: #{tpu_custom_call.1} parent=1 // pred_check
      _
    $region11: #{tpu_custom_call.1} parent=1 // pred_check_branch
      %20 = sbr.rel (0) target = $region13
    $region12: #{tpu_custom_call.1} parent=1 // pred_region
      _
    $region13: #{tpu_custom_call.1} parent=1 // pred_fallthru
      _
    // Predicated region
    $region14: #{tpu_custom_call.1} parent=1 // pred_check
      _
    $region15: #{tpu_custom_call.1} parent=1 // pred_check_branch
      %22 = sbr.rel (0) target = $region17
    $region16: #{tpu_custom_call.1} parent=1 // pred_region
      _
    $region17: #{tpu_custom_call.1} parent=1 // pred_fallthru
      _
    // Predicated region
    $region18: #{tpu_custom_call.1} parent=1 // pred_check
      _
    $region19: #{tpu_custom_call.1} parent=1 // pred_check_branch
      %24 = sbr.rel (0) target = $region21
    $region20: #{tpu_custom_call.1} parent=1 // pred_region
      _
    $region21: #{tpu_custom_call.1} parent=1 // pred_fallthru
      _
    // Predicated region
    $region22: #{tpu_custom_call.1} parent=1 // pred_check
      _
    $region23: #{tpu_custom_call.1} parent=1 // pred_check_branch
      %26 = sbr.rel (0) target = $region25
    $region24: #{tpu_custom_call.1} parent=1 // pred_region
      _
    $region25: #{tpu_custom_call.1} parent=1 // pred_fallthru
      _
    %v28 = vld [vmem:[%s2] sm:$0xf]
    %v29 = vld [vmem:[%s2 + $0x4] sm:$0xf]
    %v30 = vld [vmem:[%s2 + $0x8] sm:$0xf]
    %v31 = vld [vmem:[%s2 + $0xc] sm:$0xf]
    %v32 = vld [vmem:[%s2 + $0x10] sm:$0xf]
    %v33 = vld [vmem:[%s2 + $0x14] sm:$0xf]
    %v34 = vld [vmem:[%s2 + $0x18] sm:$0xf]
    %v35 = vld [vmem:[%s2 + $0x1c] sm:$0xf]
    %v36 = vld [vmem:[%s2 + $0x20] sm:$0xf]
    %v37 = vld [vmem:[%s2 + $0x24] sm:$0xf]
    %v38 = vld [vmem:[%s2 + $0x28] sm:$0xf]
    %v39 = vld [vmem:[%s2 + $0x2c] sm:$0xf]
    %v40 = vld [vmem:[%s3] sm:$0xff]
    %v41 = vld [vmem:[%s3 + $0x8] sm:$0xff]
    %v42 = vld [vmem:[%s3 + $0x10] sm:$0xff]
    %v43 = vld [vmem:[%s3 + $0x18] sm:$0xff]
    %v44 = vld [vmem:[%s3 + $0x20] sm:$0xff]
    %v45 = vld [vmem:[%s3 + $0x28] sm:$0xff]
    %v46 = vld [vmem:[%s3 + $0x30] sm:$0xff]
    %v47 = vld [vmem:[%s3 + $0x38] sm:$0xff]
    %v48 = vld [vmem:[%s3 + $0x40] sm:$0xff]
    %v49 = vld [vmem:[%s3 + $0x48] sm:$0xff]
    %v50 = vld [vmem:[%s3 + $0x50] sm:$0xff]
    %v51 = vld [vmem:[%s3 + $0x58] sm:$0xff]
    %v52 = vld [vmem:[%s4] sm:$0x7]
    %v53 = vld [vmem:[%s5] sm:$0x7]
    %v54 = vld [vmem:[%s0] sm:$0x3]
    %56 = vset.pattern.permute.xlu0 0
    %57 = vperm.xlu0 %56, %v40
    %v58 = vpop.permute.xlu0 %57
    %61 = vset.pattern.permute.xlu0 0
    %62 = vperm.xlu0 %61, %v41
    %v63 = vpop.permute.xlu0 %62
    %66 = vset.pattern.permute.xlu0 0
    %67 = vperm.xlu0 %66, %v42
    %v68 = vpop.permute.xlu0 %67
    %71 = vset.pattern.permute.xlu0 0
    %72 = vperm.xlu0 %71, %v43
    %v73 = vpop.permute.xlu0 %72
    %76 = vset.pattern.permute.xlu0 0
    %77 = vperm.xlu0 %76, %v44
    %v78 = vpop.permute.xlu0 %77
    %81 = vset.pattern.permute.xlu0 0
    %82 = vperm.xlu0 %81, %v45
    %v83 = vpop.permute.xlu0 %82
    %86 = vset.pattern.permute.xlu0 0
    %87 = vperm.xlu0 %86, %v46
    %v88 = vpop.permute.xlu0 %87
    %91 = vset.pattern.permute.xlu0 0
    %92 = vperm.xlu0 %91, %v47
    %v93 = vpop.permute.xlu0 %92
    %96 = vset.pattern.permute.xlu0 0
    %97 = vperm.xlu0 %96, %v48
    %v98 = vpop.permute.xlu0 %97
    %101 = vset.pattern.permute.xlu0 0
    %102 = vperm.xlu0 %101, %v49
    %v103 = vpop.permute.xlu0 %102
    %106 = vset.pattern.permute.xlu0 0
    %107 = vperm.xlu0 %106, %v50
    %v108 = vpop.permute.xlu0 %107
    %111 = vset.pattern.permute.xlu0 0
    %112 = vperm.xlu0 %111, %v51
    %v113 = vpop.permute.xlu0 %112
    %v127 = vunpack.c.l.b16 %v28
    %v128 = vunpack.c.l.b16 %v29
    %v129 = vunpack.c.l.b16 %v30
    %v130 = vunpack.c.l.b16 %v31
    %v131 = vunpack.c.l.b16 %v32
    %v132 = vunpack.c.l.b16 %v33
    %v133 = vunpack.c.l.b16 %v34
    %v134 = vunpack.c.l.b16 %v35
    %v135 = vunpack.c.l.b16 %v36
    %v136 = vunpack.c.l.b16 %v37
    %v137 = vunpack.c.l.b16 %v38
    %v138 = vunpack.c.l.b16 %v39
    %v139 = vpack.c.b16 %v128, %v127
    %v140 = vpack.c.b16 %v130, %v129
    %v141 = vpack.c.b16 %v132, %v131
    %v142 = vpack.c.b16 %v134, %v133
    %v143 = vpack.c.b16 %v136, %v135
    %v144 = vpack.c.b16 %v138, %v137
    %vm145 = vcmask 31744
    %v147 = vsel %vm145, %v139, 0
    %v150 = vsel %vm145, %v140, 0
    %v153 = vsel %vm145, %v141, 0
    %v156 = vsel %vm145, %v142, 0
    %v159 = vsel %vm145, %v143, 0
    %v162 = vsel %vm145, %v144, 0
    %vm164 = vcmask 1041408
    %v166 = vsel %vm164, %v54, 0
    %168 = vmatprep.subr.bf16.mxu0 0
    %169 = vmatpush1.bf16.msra.mxu0 %v166
    %170 = vmatprep.subr.bf16.mxu0 0
    %171 = vmatpush1.bf16.msra.mxu0 0
    %172 = vmatprep.subr.bf16.mxu0 0
    %173 = vmatpush1.bf16.msra.mxu0 0
    %174 = vmatprep.subr.bf16.mxu0 0
    %175 = vmatpush1.bf16.msra.mxu0 0
    %176 = vmatprep.subr.bf16.mxu0 0
    %177 = vmatpush1.bf16.msra.mxu0 0
    %178 = vmatprep.subr.bf16.mxu0 0
    %179 = vmatpush1.bf16.msra.mxu0 0
    %180 = vmatprep.subr.bf16.mxu0 0
    %181 = vmatpush1.bf16.msra.mxu0 0
    %182 = vmatprep.subr.bf16.mxu0 0
    %183 = vmatpush1.bf16.msra.mxu0 0
    %184 = vmatprep.subr.bf16.mxu0 0
    %185 = vmatpush1.bf16.msra.mxu0 0
    %186 = vmatprep.subr.bf16.mxu0 0
    %187 = vmatpush1.bf16.msra.mxu0 0
    %188 = vmatprep.subr.bf16.mxu0 0
    %189 = vmatpush1.bf16.msra.mxu0 0
    %190 = vmatprep.subr.bf16.mxu0 0
    %191 = vmatpush1.bf16.msra.mxu0 0
    %192 = vmatprep.subr.bf16.mxu0 0
    %193 = vmatpush1.bf16.msra.mxu0 0
    %194 = vmatprep.subr.bf16.mxu0 0
    %195 = vmatpush1.bf16.msra.mxu0 0
    %196 = vmatprep.subr.bf16.mxu0 0
    %197 = vmatpush1.bf16.msra.mxu0 0
    %198 = vmatprep.subr.bf16.mxu0 0
    %199 = vmatpush1.bf16.msra.mxu0 0
    %200 = vmatprep.mubr.bf16.mxu0 0
    %201 = vmatmul.mubr.bf16.gmra.mrb[0].mxu0 %v147
    %v202 = vpop.f32.mrb[0].mxu0
    %v203 = vadd.f32 %v58, %v202
    %v204 = vpop.f32.mrb[0].mxu0
    %v205 = vpop.f32.mrb[0].mxu0
    %v206 = vadd.f32 %v63, %v205
    %v207 = vpop.f32.mrb[0].mxu0
    %208 = vmatprep.mubr.bf16.mxu0 0
    %209 = vmatmul.mubr.bf16.gmra.mrb[0].mxu0 %v150
    %v210 = vpop.f32.mrb[0].mxu0
    %v211 = vadd.f32 %v68, %v210
    %v212 = vpop.f32.mrb[0].mxu0
    %v213 = vpop.f32.mrb[0].mxu0
    %v214 = vadd.f32 %v73, %v213
    %v215 = vpop.f32.mrb[0].mxu0
    %216 = vmatprep.mubr.bf16.mxu0 0
    %217 = vmatmul.mubr.bf16.gmra.mrb[0].mxu0 %v153
    %v218 = vpop.f32.mrb[0].mxu0
    %v219 = vadd.f32 %v78, %v218
    %v220 = vpop.f32.mrb[0].mxu0
    %v221 = vpop.f32.mrb[0].mxu0
    %v222 = vadd.f32 %v83, %v221
    %v223 = vpop.f32.mrb[0].mxu0
    %224 = vmatprep.mubr.bf16.mxu0 0
    %225 = vmatmul.mubr.bf16.gmra.mrb[0].mxu0 %v156
    %v226 = vpop.f32.mrb[0].mxu0
    %v227 = vadd.f32 %v88, %v226
    %v228 = vpop.f32.mrb[0].mxu0
    %v229 = vpop.f32.mrb[0].mxu0
    %v230 = vadd.f32 %v93, %v229
    %v231 = vpop.f32.mrb[0].mxu0
    %232 = vmatprep.mubr.bf16.mxu0 0
    %233 = vmatmul.mubr.bf16.gmra.mrb[0].mxu0 %v159
    %v234 = vpop.f32.mrb[0].mxu0
    %v235 = vadd.f32 %v98, %v234
    %v236 = vpop.f32.mrb[0].mxu0
    %v237 = vpop.f32.mrb[0].mxu0
    %v238 = vadd.f32 %v103, %v237
    %v239 = vpop.f32.mrb[0].mxu0
    %240 = vmatprep.mubr.bf16.mxu0 0
    %241 = vmatmul.mubr.bf16.gmra.mrb[0].mxu0 %v162
    %v242 = vpop.f32.mrb[0].mxu0
    %v243 = vadd.f32 %v108, %v242
    %v244 = vpop.f32.mrb[0].mxu0
    %v245 = vpop.f32.mrb[0].mxu0
    %v246 = vadd.f32 %v113, %v245
    %v247 = vpop.f32.mrb[0].mxu0
    %248 = vdwg.mxu0
    %v249 = vmax.f32 %v203, 0.0
    %v250 = vmax.f32 %v206, 0.0
    %v251 = vmax.f32 %v211, 0.0
    %v252 = vmax.f32 %v214, 0.0
    %v253 = vmax.f32 %v219, 0.0
    %v254 = vmax.f32 %v222, 0.0
    %v255 = vmax.f32 %v227, 0.0
    %v256 = vmax.f32 %v230, 0.0
    %v257 = vmax.f32 %v235, 0.0
    %v258 = vmax.f32 %v238, 0.0
    %v259 = vmax.f32 %v243, 0.0
    %v260 = vmax.f32 %v246, 0.0
    %262 = vset.pattern.permute.xlu0 0
    %263 = vperm.xlu0 %262, %v53
    %v264 = vpop.permute.xlu0 %263
    %vm266 = vcmask 785408
    %v268 = vsel %vm266, %v52, 0
    %270 = vmatprep.subr.mxu0 0.0
    %271 = vmatpush1.msra.mxu0 %v249
    %272 = vmatprep.subr.mxu0 0.0
    %273 = vmatpush1.msra.mxu0 %v250
    %274 = vmatprep.subr.mxu0 0.0
    %275 = vmatpush1.msra.mxu0 %v251
    %276 = vmatprep.subr.mxu0 0.0
    %277 = vmatpush1.msra.mxu0 %v252
    %278 = vmatprep.subr.mxu0 0.0
    %279 = vmatpush1.msra.mxu0 %v253
    %280 = vmatprep.subr.mxu0 0.0
    %281 = vmatpush1.msra.mxu0 %v254
    %282 = vmatprep.subr.mxu0 0.0
    %283 = vmatpush1.msra.mxu0 %v255
    %284 = vmatprep.subr.mxu0 0.0
    %285 = vmatpush1.msra.mxu0 %v256
    %286 = vmatprep.subr.mxu0 0.0
    %287 = vmatpush1.msra.mxu0 %v257
    %288 = vmatprep.subr.mxu0 0.0
    %289 = vmatpush1.msra.mxu0 %v258
    %290 = vmatprep.subr.mxu0 0.0
    %291 = vmatpush1.msra.mxu0 %v259
    %292 = vmatprep.subr.mxu0 0.0
    %293 = vmatpush1.msra.mxu0 %v260
    %294 = vmatprep.subr.mxu0 0.0
    %295 = vmatpush1.msra.mxu0 0.0
    %296 = vmatprep.subr.mxu0 0.0
    %297 = vmatpush1.msra.mxu0 0.0
    %298 = vmatprep.subr.mxu0 0.0
    %299 = vmatpush1.msra.mxu0 0.0
    %300 = vmatprep.subr.mxu0 0.0
    %301 = vmatpush1.msra.mxu0 0.0
    %302 = vmatprep.subr.mxu0 0.0
    %303 = vmatpush1.msra.mxu0 0.0
    %304 = vmatprep.subr.mxu0 0.0
    %305 = vmatpush1.msra.mxu0 0.0
    %306 = vmatprep.subr.mxu0 0.0
    %307 = vmatpush1.msra.mxu0 0.0
    %308 = vmatprep.subr.mxu0 0.0
    %309 = vmatpush1.msra.mxu0 0.0
    %310 = vmatprep.subr.mxu0 0.0
    %311 = vmatpush1.msra.mxu0 0.0
    %312 = vmatprep.subr.mxu0 0.0
    %313 = vmatpush1.msra.mxu0 0.0
    %314 = vmatprep.subr.mxu0 0.0
    %315 = vmatpush1.msra.mxu0 0.0
    %316 = vmatprep.subr.mxu0 0.0
    %317 = vmatpush1.msra.mxu0 0.0
    %318 = vmatprep.subr.mxu0 0.0
    %319 = vmatpush1.msra.mxu0 0.0
    %320 = vmatprep.subr.mxu0 0.0
    %321 = vmatpush1.msra.mxu0 0.0
    %322 = vmatprep.subr.mxu0 0.0
    %323 = vmatpush1.msra.mxu0 0.0
    %324 = vmatprep.subr.mxu0 0.0
    %325 = vmatpush1.msra.mxu0 0.0
    %326 = vmatprep.subr.mxu0 0.0
    %327 = vmatpush1.msra.mxu0 0.0
    %328 = vmatprep.subr.mxu0 0.0
    %329 = vmatpush1.msra.mxu0 0.0
    %330 = vmatprep.subr.mxu0 0.0
    %331 = vmatpush1.msra.mxu0 0.0
    %332 = vmatprep.subr.mxu0 0.0
    %333 = vmatpush1.msra.mxu0 0.0
    %334 = vmatprep.mubr.f32.mxu0 0.0
    %335 = vmatmul.mubr.f32.gmra.mrb[0].mxu0 %v268
    %v336 = vpop.f32.mrb[0].mxu0
    %v337 = vadd.f32 %v264, %v336
    %v338 = vpop.f32.mrb[0].mxu0
    %339 = vdwg.mxu0
    %vm340 = vcmask 59392
    %341 = vst.msk [vmem:[#allocation2] sm:$0x7] %vm340, %v337
    %v342 = vld [vmem:[%s1] sm:$0x3]
    %v344 = vsel %vm164, %v342, 0
    %346 = vmatprep.subr.bf16.mxu0 0
    %347 = vmatpush1.bf16.msra.mxu0 %v344
    %348 = vmatprep.subr.bf16.mxu0 0
    %349 = vmatpush1.bf16.msra.mxu0 0
    %350 = vmatprep.subr.bf16.mxu0 0
    %351 = vmatpush1.bf16.msra.mxu0 0
    %352 = vmatprep.subr.bf16.mxu0 0
    %353 = vmatpush1.bf16.msra.mxu0 0
    %354 = vmatprep.subr.bf16.mxu0 0
    %355 = vmatpush1.bf16.msra.mxu0 0
    %356 = vmatprep.subr.bf16.mxu0 0
    %357 = vmatpush1.bf16.msra.mxu0 0
    %358 = vmatprep.subr.bf16.mxu0 0
    %359 = vmatpush1.bf16.msra.mxu0 0
    %360 = vmatprep.subr.bf16.mxu0 0
    %361 = vmatpush1.bf16.msra.mxu0 0
    %362 = vmatprep.subr.bf16.mxu0 0
    %363 = vmatpush1.bf16.msra.mxu0 0
    %364 = vmatprep.subr.bf16.mxu0 0
    %365 = vmatpush1.bf16.msra.mxu0 0
    %366 = vmatprep.subr.bf16.mxu0 0
    %367 = vmatpush1.bf16.msra.mxu0 0
    %368 = vmatprep.subr.bf16.mxu0 0
    %369 = vmatpush1.bf16.msra.mxu0 0
    %370 = vmatprep.subr.bf16.mxu0 0
    %371 = vmatpush1.bf16.msra.mxu0 0
    %372 = vmatprep.subr.bf16.mxu0 0
    %373 = vmatpush1.bf16.msra.mxu0 0
    %374 = vmatprep.subr.bf16.mxu0 0
    %375 = vmatpush1.bf16.msra.mxu0 0
    %376 = vmatprep.subr.bf16.mxu0 0
    %377 = vmatpush1.bf16.msra.mxu0 0
    %378 = vmatprep.mubr.bf16.mxu0 0
    %379 = vmatmul.mubr.bf16.gmra.mrb[0].mxu0 %v159
    %v380 = vpop.f32.mrb[0].mxu0
    %v381 = vadd.f32 %v98, %v380
    %v382 = vpop.f32.mrb[0].mxu0
    %v383 = vpop.f32.mrb[0].mxu0
    %v384 = vadd.f32 %v103, %v383
    %v385 = vpop.f32.mrb[0].mxu0
    %386 = vmatprep.mubr.bf16.mxu0 0
    %387 = vmatmul.mubr.bf16.gmra.mrb[0].mxu0 %v162
    %v388 = vpop.f32.mrb[0].mxu0
    %v389 = vadd.f32 %v108, %v388
    %v390 = vpop.f32.mrb[0].mxu0
    %v391 = vpop.f32.mrb[0].mxu0
    %v392 = vadd.f32 %v113, %v391
    %v393 = vpop.f32.mrb[0].mxu0
    %394 = vdwg.mxu0
    %v395 = vmax.f32 %v381, 0.0
    %v396 = vmax.f32 %v384, 0.0
    %v397 = vmax.f32 %v389, 0.0
    %v398 = vmax.f32 %v392, 0.0
    %v399 = vrot.slane %v52, 2
    %400 = vrot.lane.b32.xlu0 %v399, 64
    %v401 = vpop.permute.xlu0 %400
    %v402 = vrot.slane %v264, 2
    %vm404 = vcmask 261120
    %v405 = vsel %vm404, %v401, 0
    %407 = vmatprep.subr.mxu0 0.0
    %408 = vmatpush1.msra.mxu0 %v395
    %409 = vmatprep.subr.mxu0 0.0
    %410 = vmatpush1.msra.mxu0 %v396
    %411 = vmatprep.subr.mxu0 0.0
    %412 = vmatpush1.msra.mxu0 %v397
    %413 = vmatprep.subr.mxu0 0.0
    %414 = vmatpush1.msra.mxu0 %v398
    %415 = vmatprep.subr.mxu0 0.0
    %416 = vmatpush1.msra.mxu0 0.0
    %417 = vmatprep.subr.mxu0 0.0
    %418 = vmatpush1.msra.mxu0 0.0
    %419 = vmatprep.subr.mxu0 0.0
    %420 = vmatpush1.msra.mxu0 0.0
    %421 = vmatprep.subr.mxu0 0.0
    %422 = vmatpush1.msra.mxu0 0.0
    %423 = vmatprep.subr.mxu0 0.0
    %424 = vmatpush1.msra.mxu0 0.0
    %425 = vmatprep.subr.mxu0 0.0
    %426 = vmatpush1.msra.mxu0 0.0
    %427 = vmatprep.subr.mxu0 0.0
    %428 = vmatpush1.msra.mxu0 0.0
    %429 = vmatprep.subr.mxu0 0.0
    %430 = vmatpush1.msra.mxu0 0.0
    %431 = vmatprep.subr.mxu0 0.0
    %432 = vmatpush1.msra.mxu0 0.0
    %433 = vmatprep.subr.mxu0 0.0
    %434 = vmatpush1.msra.mxu0 0.0
    %435 = vmatprep.subr.mxu0 0.0
    %436 = vmatpush1.msra.mxu0 0.0
    %437 = vmatprep.subr.mxu0 0.0
    %438 = vmatpush1.msra.mxu0 0.0
    %439 = vmatprep.subr.mxu0 0.0
    %440 = vmatpush1.msra.mxu0 0.0
    %441 = vmatprep.subr.mxu0 0.0
    %442 = vmatpush1.msra.mxu0 0.0
    %443 = vmatprep.subr.mxu0 0.0
    %444 = vmatpush1.msra.mxu0 0.0
    %445 = vmatprep.subr.mxu0 0.0
    %446 = vmatpush1.msra.mxu0 0.0
    %447 = vmatprep.subr.mxu0 0.0
    %448 = vmatpush1.msra.mxu0 0.0
    %449 = vmatprep.subr.mxu0 0.0
    %450 = vmatpush1.msra.mxu0 0.0
    %451 = vmatprep.subr.mxu0 0.0
    %452 = vmatpush1.msra.mxu0 0.0
    %453 = vmatprep.subr.mxu0 0.0
    %454 = vmatpush1.msra.mxu0 0.0
    %455 = vmatprep.subr.mxu0 0.0
    %456 = vmatpush1.msra.mxu0 0.0
    %457 = vmatprep.subr.mxu0 0.0
    %458 = vmatpush1.msra.mxu0 0.0
    %459 = vmatprep.subr.mxu0 0.0
    %460 = vmatpush1.msra.mxu0 0.0
    %461 = vmatprep.subr.mxu0 0.0
    %462 = vmatpush1.msra.mxu0 0.0
    %463 = vmatprep.subr.mxu0 0.0
    %464 = vmatpush1.msra.mxu0 0.0
    %465 = vmatprep.subr.mxu0 0.0
    %466 = vmatpush1.msra.mxu0 0.0
    %467 = vmatprep.subr.mxu0 0.0
    %468 = vmatpush1.msra.mxu0 0.0
    %469 = vmatprep.subr.mxu0 0.0
    %470 = vmatpush1.msra.mxu0 0.0
    %471 = vmatprep.mubr.f32.mxu0 0.0
    %472 = vmatmul.mubr.f32.gmra.mrb[0].mxu0 %v405
    %v473 = vpop.f32.mrb[0].mxu0
    %v474 = vadd.f32 %v402, %v473
    %v475 = vpop.f32.mrb[0].mxu0
    %476 = vdwg.mxu0
    %vm477 = vcmask 57344
    %478 = vst.msk [vmem:[#allocation4] sm:$0x1] %vm477, %v474
    // Predicated region
    $region26: #{tpu_custom_call.1} parent=1 // pred_check
      _
    $region27: #{tpu_custom_call.1} parent=1 // pred_check_branch
      %480 = sbr.rel (0) target = $region29
    $region28: #{tpu_custom_call.1} parent=1 // pred_region
      %s482 = ssub.s32 64, 64
      %483 = vsyncadd [#allocation3], %s482
      %s485 = sshll.u32 [#allocation2], 4
      %s486 = int_to_ptr.vmem [resolvable:$true] %s485
      %488 = dma.vmem_to_hbm [thread:$0]  %s486, 64, %s6, [#allocation3]
    $region29: #{tpu_custom_call.1} parent=1 // pred_fallthru
      _
    // Predicated region
    $region30: #{tpu_custom_call.1} parent=1 // pred_check
      _
    $region31: #{tpu_custom_call.1} parent=1 // pred_check_branch
      %490 = sbr.rel (0) target = $region33
    $region32: #{tpu_custom_call.1} parent=1 // pred_region
      %s492 = ssub.s32 16, 16
      %493 = vsyncadd [#allocation5], %s492
      %s495 = sshll.u32 [#allocation4], 4
      %s496 = int_to_ptr.vmem [resolvable:$true] %s495
      %498 = dma.vmem_to_hbm [thread:$0]  %s496, 16, %s7, [#allocation5]
    $region33: #{tpu_custom_call.1} parent=1 // pred_fallthru
      _
    // Predicated region
    $region34: #{tpu_custom_call.1} parent=1 // pred_check
      _
    $region35: #{tpu_custom_call.1} parent=1 // pred_check_branch
      %500 = sbr.rel (0) target = $region37
    $region36: #{tpu_custom_call.1} parent=1 // pred_region
      %501 = dma.done [#allocation3], 64
    $region37: #{tpu_custom_call.1} parent=1 // pred_fallthru
      _
    // Predicated region
    $region38: #{tpu_custom_call.1} parent=1 // pred_check
      _
    $region39: #{tpu_custom_call.1} parent=1 // pred_check_branch
      %503 = sbr.rel (0) target = $region41
    $region40: #{tpu_custom_call.1} parent=1 // pred_region
      %504 = dma.done [#allocation5], 16
    $region41: #{tpu_custom_call.1} parent=1 // pred_fallthru
      _
    %505 = vsyncpa [#allocation3], 1
    %506 = vsyncpa [#allocation5], 1

</llo_original>
